<compile_context>
chip_gen: v7x
topology: tpu7x:2x2x1
jax: 0.10.0
libtpu: 0.0.40
codegen_flags: <defaults>
</compile_context>

<pallas_src>
import jax
import jax.numpy as jnp
from jax.experimental import pallas as pl
from jax.experimental.pallas import tpu as pltpu


def _round_up(x, m):
    return ((x + m - 1) // m) * m


def _sublane_multiple(dtype):
    # f32 -> 8 rows/sublane tile, bf16 -> 16, int8/fp8 -> 32 (sublane packing).
    return max(8, 32 // jnp.dtype(dtype).itemsize)


def _vmem_budget_bytes():
    # ~75% of physical VMEM: ~96 MiB on v5e/v6e (128 MiB), ~48 MiB on v7x (64 MiB).
    try:
        cap = pltpu.get_tpu_info().vmem_capacity_bytes
    except Exception:
        cap = 64 * 1024 * 1024  # conservative fallback (v7x-sized)
    return (cap * 3) // 4


def _pick_tk(d, cap):
    """Feature-dim (K) tile: full D if small, else the largest 128-multiple divisor
    of D that is <= cap (the K axis is a contraction, so ragged K blocks are not
    allowed -- garbage in the OOB region would corrupt the accumulator)."""
    if d <= cap:
        return d
    for tk in range(cap - cap % 128, 0, -128):
        if d % tk == 0:
            return tk
    # TODO(synk): no 128-aligned divisor; pad D to a 128 multiple in the producer
    # if a single (tb, D) block ever exceeds VMEM for huge, awkward D.
    return d


def _pick_tb(batch, tk, x_itemsize, budget, sublane, tb_cap=4096):
    # Resident VMEM per batch tile:
    #   x   : 2 * tb * tk * x_itemsize   (double-buffered pipeline)
    #   w1  : 2 * tk * 64 * x_itemsize   (double-buffered over K)
    #   acc : tb * 64 * 4                (f32 scratch)
    #   out : 2 * tb * 4
    #   consts: biases + w2 + w3 (tiny)
    fixed = 2 * tk * 64 * x_itemsize + (64 * 32 + 64 + 32 + 32 + 1) * 4 * 2
    per_row = 2 * tk * x_itemsize + 64 * 4 + 2 * 4
    tb = (budget - fixed) // per_row
    tb = min(tb, tb_cap, _round_up(batch, sublane))
    tb = max(sublane, (tb // sublane) * sublane)
    return int(tb)


def mlp_kernel(x_ref, w1_ref, b1_ref, w2_ref, b2_ref, w3t_ref, b3_ref,
               o_ref, acc_ref):
    k = pl.program_id(1)

    @pl.when(k == 0)
    def _init():
        acc_ref[...] = jnp.zeros_like(acc_ref)

    # fc1 partial product for this K slice (MXU, f32 accumulation).
    acc_ref[...] += jnp.dot(x_ref[...], w1_ref[...],
                            preferred_element_type=jnp.float32)

    @pl.when(k == pl.num_programs(1) - 1)
    def _epilogue():
        h1 = jnp.maximum(acc_ref[...] + b1_ref[...], 0.0)                  # (tb, 64) f32
        h2 = jnp.dot(h1, w2_ref[...], preferred_element_type=jnp.float32)
        h2 = jnp.maximum(h2 + b2_ref[...], 0.0)                            # (tb, 32) f32
        # fc3 (32 -> 1): VPU mul + XLU cross-lane reduce instead of a padded
        # N=1 MXU matmul; w3 arrives pre-transposed (1, 32), no per-step relayout.
        logits = jnp.sum(h2 * w3t_ref[...], axis=-1, keepdims=True) + b3_ref[...]
        o_ref[...] = jax.nn.sigmoid(logits)                                # (tb, 1) f32


def neural_net_forward(x, params, *, tile_b=None, tile_k=2048):
    """Forward pass of NeuralNet. x: (B, C, H, W) or (B, D); returns (B, 1) f32.

    The fc1 matmul runs in x.dtype (hand in bf16 activations from the producer for
    the bandwidth fast path -- this wrapper never casts x); accumulation and the
    bias/ReLU/sigmoid epilogue are always f32.
    """
    w1, b1, w2, b2, w3, b3 = params
    batch = x.shape[0]
    x_flat = x.reshape(batch, -1)                     # == torch.flatten(x, 1)
    d = x_flat.shape[1]
    x_dtype = x_flat.dtype
    x_itemsize = jnp.dtype(x_dtype).itemsize

    # fc1 weight in the activation dtype (small stream); everything downstream f32.
    w1 = w1.astype(x_dtype)
    b1 = b1.reshape(1, 64).astype(jnp.float32)
    w2 = w2.astype(jnp.float32)
    b2 = b2.reshape(1, 32).astype(jnp.float32)
    w3t = w3.reshape(32, 1).T.astype(jnp.float32)     # pre-transpose once -> (1, 32)
    b3 = b3.reshape(1, 1).astype(jnp.float32)

    sublane = _sublane_multiple(x_dtype)
    budget = int(_vmem_budget_bytes())
    tk = _pick_tk(d, tile_k)
    if tile_b is None:
        tb = _pick_tb(batch, tk, x_itemsize, budget, sublane)
    else:
        tb = max(sublane,
                 _round_up(min(tile_b, _round_up(batch, sublane)), sublane))
    num_b = pl.cdiv(batch, tb)        # ragged last block: masked writes, no jnp.pad
    num_k = d // tk

    cost = pl.CostEstimate(
        flops=2 * batch * (d * 64 + 64 * 32 + 32),
        transcendentals=batch,                                  # sigmoid exp
        bytes_accessed=(batch * d * x_itemsize                  # x (dominant stream)
                        + num_b * d * 64 * x_itemsize           # w1 re-read per batch tile
                        + (64 * 32 + 64 + 32 + 32 + 1) * 4      # resident consts (once)
                        + batch * 4),                           # output
    )

    return pl.pallas_call(
        mlp_kernel,
        out_shape=jax.ShapeDtypeStruct((batch, 1), jnp.float32),
        grid_spec=pltpu.PrefetchScalarGridSpec(
            num_scalar_prefetch=0,
            grid=(num_b, num_k),
            in_specs=[
                pl.BlockSpec((tb, tk), lambda i, k: (i, k)),    # x batch/K tile
                pl.BlockSpec((tk, 64), lambda i, k: (k, 0)),    # w1 K-slice
                pl.BlockSpec((1, 64), lambda i, k: (0, 0)),     # constant blocks:
                pl.BlockSpec((64, 32), lambda i, k: (0, 0)),    #   DMA'd once,
                pl.BlockSpec((1, 32), lambda i, k: (0, 0)),     #   stay resident
                pl.BlockSpec((1, 32), lambda i, k: (0, 0)),     #   (w3 pre-transposed)
                pl.BlockSpec((1, 1), lambda i, k: (0, 0)),
            ],
            out_specs=pl.BlockSpec((tb, 1), lambda i, k: (i, 0)),
            scratch_shapes=[pltpu.VMEM((tb, 64), jnp.float32)],  # fc1 accumulator
        ),
        compiler_params=pltpu.CompilerParams(
            dimension_semantics=("parallel", "arbitrary"),
            vmem_limit_bytes=budget,
        ),
        cost_estimate=cost,
    )(x_flat, w1, b1, w2, b2, w3t, b3)


def init_params(key, input_dim):
    """PyTorch-style init: U(-1/sqrt(fan_in), +1/sqrt(fan_in)); W stored (in, out)."""
    def linear_init(key, fan_in, fan_out):
        kw, kb = jax.random.split(key)
        bound = 1.0 / jnp.sqrt(jnp.float32(fan_in))
        w = jax.random.uniform(kw, (fan_in, fan_out), jnp.float32, -bound, bound)
        b = jax.random.uniform(kb, (1, fan_out), jnp.float32, -bound, bound)
        return w, b

    k1, k2, k3 = jax.random.split(key, 3)
    w1, b1 = linear_init(k1, input_dim, 64)
    w2, b2 = linear_init(k2, 64, 32)
    w3, b3 = linear_init(k3, 32, 1)
    return (w1, b1, w2, b2, w3, b3)


def ref_forward(x, params):
    w1, b1, w2, b2, w3, b3 = params
    xf = x.reshape(x.shape[0], -1).astype(jnp.float32)
    h1 = jnp.maximum(xf @ w1 + b1, 0.0)
    h2 = jnp.maximum(h1 @ w2 + b2, 0.0)
    return jax.nn.sigmoid(h2 @ w3 + b3)


if __name__ == "__main__":
    key = jax.random.PRNGKey(0)
    kx, kp, kx2 = jax.random.split(key, 3)

    # Small NCHW input consistent with torch.flatten(x, 1): B=2, C=4, H=W=16
    B, C, H, W = 2, 4, 16, 16
    D = C * H * W
    x = jax.random.normal(kx, (B, C, H, W), jnp.float32)
    params = init_params(kp, D)

    # 1) Exact-semantics f32 run at the spec's small shape (single tile).
    out = neural_net_forward(x, params)
    jax.block_until_ready(out)
    ref = ref_forward(x, params)
    assert out.shape == (B, 1), out.shape
    assert jnp.allclose(out, ref, atol=1e-5, rtol=1e-5), "f32 mismatch vs reference"

    # 2) bf16 fast path with a ragged batch, multiple batch tiles and multiple K
    #    tiles.  The activation arrives bf16 from the "producer"; the wrapper never
    #    casts x, so no extra HBM pass.  Loose tolerance vs the f32 reference.
    B2 = 300
    x2 = jax.random.normal(kx2, (B2, C, H, W), jnp.float32).astype(jnp.bfloat16)
    out2 = neural_net_forward(x2, params, tile_b=128, tile_k=256)
    jax.block_until_ready(out2)
    ref2 = ref_forward(x2.astype(jnp.float32), params)
    assert out2.shape == (B2, 1), out2.shape
    assert jnp.allclose(out2, ref2, atol=2e-2, rtol=2e-2), "bf16 mismatch vs reference"

    print("KERNEL_OK")
</pallas_src>

<mosaic_0001>
module attributes {stable_mosaic.version = 11 : i64} {
  func.func @mlp_kernel(%arg0: i32, %arg1: i32, %arg2: memref<8x1024xf32, #tpu.memory_space<vmem>>, %arg3: memref<1024x64xf32, #tpu.memory_space<vmem>>, %arg4: memref<1x64xf32, #tpu.memory_space<vmem>>, %arg5: memref<64x32xf32, #tpu.memory_space<vmem>>, %arg6: memref<1x32xf32, #tpu.memory_space<vmem>>, %arg7: memref<1x32xf32, #tpu.memory_space<vmem>>, %arg8: memref<1x1xf32, #tpu.memory_space<vmem>>, %arg9: memref<8x1xf32, #tpu.memory_space<vmem>>, %arg10: memref<8x64xf32, #tpu.memory_space<vmem>>) attributes {dimension_semantics = [#tpu.dimension_semantics<parallel>, #tpu.dimension_semantics<arbitrary>], iteration_bounds = array<i64: 1, 1>, scalar_prefetch = 0 : i64, scratch_operands = 1 : i64, tpu.core_type = #tpu.core_type<tc>, window_params = [{transform_indices = @transform_0, window_bounds = array<i64: 8, 1024>}, {transform_indices = @transform_1, window_bounds = array<i64: 1024, 64>}, {pipeline_mode = #tpu.pipeline_mode<synchronous>, transform_indices = @transform_2, window_bounds = array<i64: 1, 64>}, {pipeline_mode = #tpu.pipeline_mode<synchronous>, transform_indices = @transform_3, window_bounds = array<i64: 64, 32>}, {pipeline_mode = #tpu.pipeline_mode<synchronous>, transform_indices = @transform_4, window_bounds = array<i64: 1, 32>}, {pipeline_mode = #tpu.pipeline_mode<synchronous>, transform_indices = @transform_5, window_bounds = array<i64: 1, 32>}, {pipeline_mode = #tpu.pipeline_mode<synchronous>, transform_indices = @transform_6, window_bounds = array<i64: 1, 1>}, {transform_indices = @transform_7, window_bounds = array<i64: 8, 1>}]} {
    %c0_i32 = arith.constant 0 : i32
    %0 = arith.cmpi eq, %arg1, %c0_i32 : i32
    %1 = arith.extui %0 : i1 to i32
    %c0_i32_0 = arith.constant 0 : i32
    %2 = arith.cmpi ne, %1, %c0_i32_0 : i32
    scf.if %2 {
      %cst_10 = arith.constant 0.000000e+00 : f32
      %12 = vector.broadcast %cst_10 : f32 to vector<8x64xf32>
      %c0_11 = arith.constant 0 : index
      %c0_12 = arith.constant 0 : index
      %13 = vector.load %arg10[%c0_11, %c0_12] : memref<8x64xf32, #tpu.memory_space<vmem>>, vector<8x64xf32>
      tpu.vector_store %arg10[%c0_11, %c0_12], %12 {strides = array<i32>} : memref<8x64xf32, #tpu.memory_space<vmem>>, vector<8x64xf32>,
    } else {
    }
    %c0 = arith.constant 0 : index
    %c0_1 = arith.constant 0 : index
    %3 = vector.load %arg10[%c0, %c0_1] : memref<8x64xf32, #tpu.memory_space<vmem>>, vector<8x64xf32>
    %c0_2 = arith.constant 0 : index
    %c0_3 = arith.constant 0 : index
    %4 = vector.load %arg2[%c0_2, %c0_3] : memref<8x1024xf32, #tpu.memory_space<vmem>>, vector<8x1024xf32>
    %c0_4 = arith.constant 0 : index
    %c0_5 = arith.constant 0 : index
    %5 = vector.load %arg3[%c0_4, %c0_5] : memref<1024x64xf32, #tpu.memory_space<vmem>>, vector<1024x64xf32>
    %cst = arith.constant dense<0.000000e+00> : vector<8x64xf32>
    %6 = tpu.matmul %4, %5, %cst {dimension_numbers = #tpu.dot_dimension_numbers<[1], [0], [0], [1], [0, 0, 1, 1], [], []>} : vector<8x1024xf32>, vector<1024x64xf32>, vector<8x64xf32> -> vector<8x64xf32>
    %7 = arith.addf %3, %6 : vector<8x64xf32>
    %c0_6 = arith.constant 0 : index
    %c0_7 = arith.constant 0 : index
    %8 = vector.load %arg10[%c0_6, %c0_7] : memref<8x64xf32, #tpu.memory_space<vmem>>, vector<8x64xf32>
    tpu.vector_store %arg10[%c0_6, %c0_7], %7 {strides = array<i32>} : memref<8x64xf32, #tpu.memory_space<vmem>>, vector<8x64xf32>,
    %c0_i32_8 = arith.constant 0 : i32
    %9 = arith.cmpi eq, %arg1, %c0_i32_8 : i32
    %10 = arith.extui %9 : i1 to i32
    %c0_i32_9 = arith.constant 0 : i32
    %11 = arith.cmpi ne, %10, %c0_i32_9 : i32
    scf.if %11 {
      %c0_10 = arith.constant 0 : index
      %c0_11 = arith.constant 0 : index
      %12 = vector.load %arg10[%c0_10, %c0_11] : memref<8x64xf32, #tpu.memory_space<vmem>>, vector<8x64xf32>
      %c0_12 = arith.constant 0 : index
      %c0_13 = arith.constant 0 : index
      %13 = vector.load %arg4[%c0_12, %c0_13] : memref<1x64xf32, #tpu.memory_space<vmem>>, vector<1x64xf32>
      %14 = vector.broadcast %13 : vector<1x64xf32> to vector<8x64xf32>
      %15 = arith.addf %12, %14 : vector<8x64xf32>
      %cst_14 = arith.constant 0.000000e+00 : f32
      %16 = vector.broadcast %cst_14 : f32 to vector<8x64xf32>
      %17 = arith.maximumf %15, %16 : vector<8x64xf32>
      %c0_15 = arith.constant 0 : index
      %c0_16 = arith.constant 0 : index
      %18 = vector.load %arg5[%c0_15, %c0_16] : memref<64x32xf32, #tpu.memory_space<vmem>>, vector<64x32xf32>
      %cst_17 = arith.constant dense<0.000000e+00> : vector<8x32xf32>
      %19 = tpu.matmul %17, %18, %cst_17 {dimension_numbers = #tpu.dot_dimension_numbers<[1], [0], [0], [1], [0, 0, 1, 1], [], []>} : vector<8x64xf32>, vector<64x32xf32>, vector<8x32xf32> -> vector<8x32xf32>
      %c0_18 = arith.constant 0 : index
      %c0_19 = arith.constant 0 : index
      %20 = vector.load %arg6[%c0_18, %c0_19] : memref<1x32xf32, #tpu.memory_space<vmem>>, vector<1x32xf32>
      %21 = vector.broadcast %20 : vector<1x32xf32> to vector<8x32xf32>
      %22 = arith.addf %19, %21 : vector<8x32xf32>
      %cst_20 = arith.constant 0.000000e+00 : f32
      %23 = vector.broadcast %cst_20 : f32 to vector<8x32xf32>
      %24 = arith.maximumf %22, %23 : vector<8x32xf32>
      %c0_21 = arith.constant 0 : index
      %c0_22 = arith.constant 0 : index
      %25 = vector.load %arg7[%c0_21, %c0_22] : memref<1x32xf32, #tpu.memory_space<vmem>>, vector<1x32xf32>
      %26 = vector.broadcast %25 : vector<1x32xf32> to vector<8x32xf32>
      %27 = arith.mulf %24, %26 : vector<8x32xf32>
      %cst_23 = arith.constant dense<0.000000e+00> : vector<8xf32>
      %28 = vector.multi_reduction <add>, %27, %cst_23 [1] : vector<8x32xf32> to vector<8xf32>
      %29 = vector.shape_cast %28 : vector<8xf32> to vector<8x1xf32>
      %c0_24 = arith.constant 0 : index
      %c0_25 = arith.constant 0 : index
      %30 = vector.load %arg8[%c0_24, %c0_25] : memref<1x1xf32, #tpu.memory_space<vmem>>, vector<1x1xf32>
      %31 = vector.broadcast %30 : vector<1x1xf32> to vector<8x1xf32>
      %32 = arith.addf %29, %31 : vector<8x1xf32>
      %33 = arith.negf %32 : vector<8x1xf32>
      %34 = math.exp %33 : vector<8x1xf32>
      %cst_26 = arith.constant 1.000000e+00 : f32
      %35 = vector.broadcast %cst_26 : f32 to vector<8x1xf32>
      %36 = arith.addf %35, %34 : vector<8x1xf32>
      %37 = arith.divf %35, %36 : vector<8x1xf32>
      %c0_27 = arith.constant 0 : index
      %c0_28 = arith.constant 0 : index
      %38 = vector.load %arg9[%c0_27, %c0_28] : memref<8x1xf32, #tpu.memory_space<vmem>>, vector<8x1xf32>
      tpu.vector_store %arg9[%c0_27, %c0_28], %37 {strides = array<i32>} : memref<8x1xf32, #tpu.memory_space<vmem>>, vector<8x1xf32>,
    } else {
    }
    return
  }
  func.func @transform_0(%arg0: i32, %arg1: i32) -> (i32, i32) {
    %c0_i32 = arith.constant 0 : i32
    return %arg0, %arg1 : i32, i32
  }
  func.func @transform_1(%arg0: i32, %arg1: i32) -> (i32, i32) {
    %c0_i32 = arith.constant 0 : i32
    %c0_i32_0 = arith.constant 0 : i32
    return %arg1, %c0_i32 : i32, i32
  }
  func.func @transform_2(%arg0: i32, %arg1: i32) -> (i32, i32) {
    %c0_i32 = arith.constant 0 : i32
    %c0_i32_0 = arith.constant 0 : i32
    %c0_i32_1 = arith.constant 0 : i32
    return %c0_i32, %c0_i32_0 : i32, i32
  }
  func.func @transform_3(%arg0: i32, %arg1: i32) -> (i32, i32) {
    %c0_i32 = arith.constant 0 : i32
    %c0_i32_0 = arith.constant 0 : i32
    %c0_i32_1 = arith.constant 0 : i32
    return %c0_i32, %c0_i32_0 : i32, i32
  }
  func.func @transform_4(%arg0: i32, %arg1: i32) -> (i32, i32) {
    %c0_i32 = arith.constant 0 : i32
    %c0_i32_0 = arith.constant 0 : i32
    %c0_i32_1 = arith.constant 0 : i32
    return %c0_i32, %c0_i32_0 : i32, i32
  }
  func.func @transform_5(%arg0: i32, %arg1: i32) -> (i32, i32) {
    %c0_i32 = arith.constant 0 : i32
    %c0_i32_0 = arith.constant 0 : i32
    %c0_i32_1 = arith.constant 0 : i32
    return %c0_i32, %c0_i32_0 : i32, i32
  }
  func.func @transform_6(%arg0: i32, %arg1: i32) -> (i32, i32) {
    %c0_i32 = arith.constant 0 : i32
    %c0_i32_0 = arith.constant 0 : i32
    %c0_i32_1 = arith.constant 0 : i32
    return %c0_i32, %c0_i32_0 : i32, i32
  }
  func.func @transform_7(%arg0: i32, %arg1: i32) -> (i32, i32) {
    %c0_i32 = arith.constant 0 : i32
    %c0_i32_0 = arith.constant 0 : i32
    return %arg0, %c0_i32 : i32, i32
  }
}

</mosaic_0001>

<llo_original>
// kernel: tpu_custom_call.1
$region0: #{tpu_custom_call.1}
  #allocation0 [shape = 'u32[]', space=smem, size = 0x4, offset = 0x4, fixed_abs, tag = 'smem constant byte address 0x4 - core index']
  #allocation1 [shape = 'u32[144,128]{1,0:T(1,128)}', space=vmem, size = 0x12000, scoped, tag = 'internal scratch']
  #allocation2 [shape = 'f32[8,64]{1,0:T(8,128)}', space=vmem, size = 0x1000, scoped, tag = 'scratch operand']
  #allocation3 [shape = 'f32[1,1]{1,0:T(1,128)S(1)}', space=vmem, size = 0x200, scoped, tag = 'scoped memory for tpu_custom_call.1']
  %s0 = inlined_call_operand.vmem [shape: f32[2,1024], index: 0, kind: input, shape index: {}]
  %s1 = inlined_call_operand.vmem [shape: f32[1024,64], index: 1, kind: input, shape index: {}]
  %s2 = inlined_call_operand.vmem [shape: f32[1,64], index: 2, kind: input, shape index: {}]
  %s3 = inlined_call_operand.vmem [shape: f32[64,32], index: 3, kind: input, shape index: {}]
  %s4 = inlined_call_operand.vmem [shape: f32[1,32], index: 4, kind: input, shape index: {}]
  %s5 = inlined_call_operand.vmem [shape: f32[1,32], index: 5, kind: input, shape index: {}]
  %s6 = inlined_call_operand.<no memory space> [shape: f32[1,1], index: 6, kind: input, shape index: {}]
  %s7 = inlined_call_operand.vmem [shape: f32[2,1], index: 7, kind: output, shape index: {}]
  %s8 = sld [smem:[#allocation0]]
  $region76: #{tpu_custom_call.1} parent=0
    _
  %s10 = ssub.s32 1, %s8
  %s11 = scalar_select 0, %s10, %s8
  %v12 = vstv %s6
  %13 = vst [vmem:[#allocation3] sm:$0x1] %v12
  $region1: #{tpu_custom_call.1} parent=0
    #allocation4 [shape = 'u8[4096]{0}', space=vmem, size = 0x1000, scoped, tag = 'output window, operand 0, single buffered']
    // Predicated region
    $region2: #{tpu_custom_call.1} parent=1 // pred_check
      _
    $region3: #{tpu_custom_call.1} parent=1 // pred_check_branch
      %15 = sbr.rel (0) target = $region5
    $region4: #{tpu_custom_call.1} parent=1 // pred_region
      _
    $region5: #{tpu_custom_call.1} parent=1 // pred_fallthru
      _
    // Predicated region
    $region6: #{tpu_custom_call.1} parent=1 // pred_check
      _
    $region7: #{tpu_custom_call.1} parent=1 // pred_check_branch
      %17 = sbr.rel (0) target = $region9
    $region8: #{tpu_custom_call.1} parent=1 // pred_region
      _
    $region9: #{tpu_custom_call.1} parent=1 // pred_fallthru
      _
    // Predicated region
    $region10: #{tpu_custom_call.1} parent=1 // pred_check
      _
    $region11: #{tpu_custom_call.1} parent=1 // pred_check_branch
      %19 = sbr.rel (0) target = $region13
    $region12: #{tpu_custom_call.1} parent=1 // pred_region
      _
    $region13: #{tpu_custom_call.1} parent=1 // pred_fallthru
      _
    // Predicated region
    $region14: #{tpu_custom_call.1} parent=1 // pred_check
      _
    $region15: #{tpu_custom_call.1} parent=1 // pred_check_branch
      %21 = sbr.rel (0) target = $region17
    $region16: #{tpu_custom_call.1} parent=1 // pred_region
      _
    $region17: #{tpu_custom_call.1} parent=1 // pred_fallthru
      _
    // Predicated region
    $region18: #{tpu_custom_call.1} parent=1 // pred_check
      _
    $region19: #{tpu_custom_call.1} parent=1 // pred_check_branch
      %23 = sbr.rel (0) target = $region21
    $region20: #{tpu_custom_call.1} parent=1 // pred_region
      _
    $region21: #{tpu_custom_call.1} parent=1 // pred_fallthru
      _
    // Predicated region
    $region22: #{tpu_custom_call.1} parent=1 // pred_check
      _
    $region23: #{tpu_custom_call.1} parent=1 // pred_check_branch
      %25 = sbr.rel (0) target = $region25
    $region24: #{tpu_custom_call.1} parent=1 // pred_region
      _
    $region25: #{tpu_custom_call.1} parent=1 // pred_fallthru
      _
    // Predicated region
    $region26: #{tpu_custom_call.1} parent=1 // pred_check
      _
    $region27: #{tpu_custom_call.1} parent=1 // pred_check_branch
      %27 = sbr.rel (0) target = $region29
    $region28: #{tpu_custom_call.1} parent=1 // pred_region
      _
    $region29: #{tpu_custom_call.1} parent=1 // pred_fallthru
      _
    %p28 = scmp.eq.s32.totalorder 0, 0
    // Predicated region
    $region30: #{tpu_custom_call.1} parent=1 // pred_check
      %p29 = pneg %p28
    $region31: #{tpu_custom_call.1} parent=1 // pred_check_branch
      %31 = sbr.rel (%p29) target = $region33
    $region32: #{tpu_custom_call.1} parent=1 // pred_region
      %vm32 = vcmask 523264
      %33 = vst.msk [vmem:[#allocation2] sm:$0xff] %vm32, 0.0
    $region33: #{tpu_custom_call.1} parent=1 // pred_fallthru
      _
    %v34 = vld [vmem:[#allocation2] sm:$0xff]
    %v35 = vld [vmem:[%s0] sm:$0xff]
    %v36 = vld [vmem:[%s0 + $0x8] sm:$0xff]
    %v37 = vld [vmem:[%s0 + $0x10] sm:$0xff]
    %v38 = vld [vmem:[%s0 + $0x18] sm:$0xff]
    %v39 = vld [vmem:[%s0 + $0x20] sm:$0xff]
    %v40 = vld [vmem:[%s0 + $0x28] sm:$0xff]
    %v41 = vld [vmem:[%s0 + $0x30] sm:$0xff]
    %v42 = vld [vmem:[%s0 + $0x38] sm:$0xff]
    %v43 = vld [vmem:[%s1] sm:$0xff]
    %v44 = vld [vmem:[%s1 + $0x8] sm:$0xff]
    %v45 = vld [vmem:[%s1 + $0x10] sm:$0xff]
    %v46 = vld [vmem:[%s1 + $0x18] sm:$0xff]
    %v47 = vld [vmem:[%s1 + $0x20] sm:$0xff]
    %v48 = vld [vmem:[%s1 + $0x28] sm:$0xff]
    %v49 = vld [vmem:[%s1 + $0x30] sm:$0xff]
    %v50 = vld [vmem:[%s1 + $0x38] sm:$0xff]
    %v51 = vld [vmem:[%s1 + $0x40] sm:$0xff]
    %v52 = vld [vmem:[%s1 + $0x48] sm:$0xff]
    %v53 = vld [vmem:[%s1 + $0x50] sm:$0xff]
    %v54 = vld [vmem:[%s1 + $0x58] sm:$0xff]
    %v55 = vld [vmem:[%s1 + $0x60] sm:$0xff]
    %v56 = vld [vmem:[%s1 + $0x68] sm:$0xff]
    %v57 = vld [vmem:[%s1 + $0x70] sm:$0xff]
    %v58 = vld [vmem:[%s1 + $0x78] sm:$0xff]
    %v59 = vld [vmem:[%s1 + $0x80] sm:$0xff]
    %v60 = vld [vmem:[%s1 + $0x88] sm:$0xff]
    %v61 = vld [vmem:[%s1 + $0x90] sm:$0xff]
    %v62 = vld [vmem:[%s1 + $0x98] sm:$0xff]
    %v63 = vld [vmem:[%s1 + $0xa0] sm:$0xff]
    %v64 = vld [vmem:[%s1 + $0xa8] sm:$0xff]
    %v65 = vld [vmem:[%s1 + $0xb0] sm:$0xff]
    %v66 = vld [vmem:[%s1 + $0xb8] sm:$0xff]
    %v67 = vld [vmem:[%s1 + $0xc0] sm:$0xff]
    %v68 = vld [vmem:[%s1 + $0xc8] sm:$0xff]
    %v69 = vld [vmem:[%s1 + $0xd0] sm:$0xff]
    %v70 = vld [vmem:[%s1 + $0xd8] sm:$0xff]
    %v71 = vld [vmem:[%s1 + $0xe0] sm:$0xff]
    %v72 = vld [vmem:[%s1 + $0xe8] sm:$0xff]
    %v73 = vld [vmem:[%s1 + $0xf0] sm:$0xff]
    %v74 = vld [vmem:[%s1 + $0xf8] sm:$0xff]
    %v75 = vld [vmem:[%s1 + $0x100] sm:$0xff]
    %v76 = vld [vmem:[%s1 + $0x108] sm:$0xff]
    %v77 = vld [vmem:[%s1 + $0x110] sm:$0xff]
    %v78 = vld [vmem:[%s1 + $0x118] sm:$0xff]
    %v79 = vld [vmem:[%s1 + $0x120] sm:$0xff]
    %v80 = vld [vmem:[%s1 + $0x128] sm:$0xff]
    %v81 = vld [vmem:[%s1 + $0x130] sm:$0xff]
    %v82 = vld [vmem:[%s1 + $0x138] sm:$0xff]
    %v83 = vld [vmem:[%s1 + $0x140] sm:$0xff]
    %v84 = vld [vmem:[%s1 + $0x148] sm:$0xff]
    %v85 = vld [vmem:[%s1 + $0x150] sm:$0xff]
    %v86 = vld [vmem:[%s1 + $0x158] sm:$0xff]
    %v87 = vld [vmem:[%s1 + $0x160] sm:$0xff]
    %v88 = vld [vmem:[%s1 + $0x168] sm:$0xff]
    %v89 = vld [vmem:[%s1 + $0x170] sm:$0xff]
    %v90 = vld [vmem:[%s1 + $0x178] sm:$0xff]
    %v91 = vld [vmem:[%s1 + $0x180] sm:$0xff]
    %v92 = vld [vmem:[%s1 + $0x188] sm:$0xff]
    %v93 = vld [vmem:[%s1 + $0x190] sm:$0xff]
    %v94 = vld [vmem:[%s1 + $0x198] sm:$0xff]
    %v95 = vld [vmem:[%s1 + $0x1a0] sm:$0xff]
    %v96 = vld [vmem:[%s1 + $0x1a8] sm:$0xff]
    %v97 = vld [vmem:[%s1 + $0x1b0] sm:$0xff]
    %v98 = vld [vmem:[%s1 + $0x1b8] sm:$0xff]
    %v99 = vld [vmem:[%s1 + $0x1c0] sm:$0xff]
    %v100 = vld [vmem:[%s1 + $0x1c8] sm:$0xff]
    %v101 = vld [vmem:[%s1 + $0x1d0] sm:$0xff]
    %v102 = vld [vmem:[%s1 + $0x1d8] sm:$0xff]
    %v103 = vld [vmem:[%s1 + $0x1e0] sm:$0xff]
    %v104 = vld [vmem:[%s1 + $0x1e8] sm:$0xff]
    %v105 = vld [vmem:[%s1 + $0x1f0] sm:$0xff]
    %v106 = vld [vmem:[%s1 + $0x1f8] sm:$0xff]
    %v107 = vld [vmem:[%s1 + $0x200] sm:$0xff]
    %v108 = vld [vmem:[%s1 + $0x208] sm:$0xff]
    %v109 = vld [vmem:[%s1 + $0x210] sm:$0xff]
    %v110 = vld [vmem:[%s1 + $0x218] sm:$0xff]
    %v111 = vld [vmem:[%s1 + $0x220] sm:$0xff]
    %v112 = vld [vmem:[%s1 + $0x228] sm:$0xff]
    %v113 = vld [vmem:[%s1 + $0x230] sm:$0xff]
    %v114 = vld [vmem:[%s1 + $0x238] sm:$0xff]
    %v115 = vld [vmem:[%s1 + $0x240] sm:$0xff]
    %v116 = vld [vmem:[%s1 + $0x248] sm:$0xff]
    %v117 = vld [vmem:[%s1 + $0x250] sm:$0xff]
    %v118 = vld [vmem:[%s1 + $0x258] sm:$0xff]
    %v119 = vld [vmem:[%s1 + $0x260] sm:$0xff]
    %v120 = vld [vmem:[%s1 + $0x268] sm:$0xff]
    %v121 = vld [vmem:[%s1 + $0x270] sm:$0xff]
    %v122 = vld [vmem:[%s1 + $0x278] sm:$0xff]
    %v123 = vld [vmem:[%s1 + $0x280] sm:$0xff]
    %v124 = vld [vmem:[%s1 + $0x288] sm:$0xff]
    %v125 = vld [vmem:[%s1 + $0x290] sm:$0xff]
    %v126 = vld [vmem:[%s1 + $0x298] sm:$0xff]
    %v127 = vld [vmem:[%s1 + $0x2a0] sm:$0xff]
    %v128 = vld [vmem:[%s1 + $0x2a8] sm:$0xff]
    %v129 = vld [vmem:[%s1 + $0x2b0] sm:$0xff]
    %v130 = vld [vmem:[%s1 + $0x2b8] sm:$0xff]
    %v131 = vld [vmem:[%s1 + $0x2c0] sm:$0xff]
    %v132 = vld [vmem:[%s1 + $0x2c8] sm:$0xff]
    %v133 = vld [vmem:[%s1 + $0x2d0] sm:$0xff]
    %v134 = vld [vmem:[%s1 + $0x2d8] sm:$0xff]
    %v135 = vld [vmem:[%s1 + $0x2e0] sm:$0xff]
    %v136 = vld [vmem:[%s1 + $0x2e8] sm:$0xff]
    %v137 = vld [vmem:[%s1 + $0x2f0] sm:$0xff]
    %v138 = vld [vmem:[%s1 + $0x2f8] sm:$0xff]
    %v139 = vld [vmem:[%s1 + $0x300] sm:$0xff]
    %v140 = vld [vmem:[%s1 + $0x308] sm:$0xff]
    %v141 = vld [vmem:[%s1 + $0x310] sm:$0xff]
    %v142 = vld [vmem:[%s1 + $0x318] sm:$0xff]
    %v143 = vld [vmem:[%s1 + $0x320] sm:$0xff]
    %v144 = vld [vmem:[%s1 + $0x328] sm:$0xff]
    %v145 = vld [vmem:[%s1 + $0x330] sm:$0xff]
    %v146 = vld [vmem:[%s1 + $0x338] sm:$0xff]
    %v147 = vld [vmem:[%s1 + $0x340] sm:$0xff]
    %v148 = vld [vmem:[%s1 + $0x348] sm:$0xff]
    %v149 = vld [vmem:[%s1 + $0x350] sm:$0xff]
    %v150 = vld [vmem:[%s1 + $0x358] sm:$0xff]
    %v151 = vld [vmem:[%s1 + $0x360] sm:$0xff]
    %v152 = vld [vmem:[%s1 + $0x368] sm:$0xff]
    %v153 = vld [vmem:[%s1 + $0x370] sm:$0xff]
    %v154 = vld [vmem:[%s1 + $0x378] sm:$0xff]
    %v155 = vld [vmem:[%s1 + $0x380] sm:$0xff]
    %v156 = vld [vmem:[%s1 + $0x388] sm:$0xff]
    %v157 = vld [vmem:[%s1 + $0x390] sm:$0xff]
    %v158 = vld [vmem:[%s1 + $0x398] sm:$0xff]
    %v159 = vld [vmem:[%s1 + $0x3a0] sm:$0xff]
    %v160 = vld [vmem:[%s1 + $0x3a8] sm:$0xff]
    %v161 = vld [vmem:[%s1 + $0x3b0] sm:$0xff]
    %v162 = vld [vmem:[%s1 + $0x3b8] sm:$0xff]
    %v163 = vld [vmem:[%s1 + $0x3c0] sm:$0xff]
    %v164 = vld [vmem:[%s1 + $0x3c8] sm:$0xff]
    %v165 = vld [vmem:[%s1 + $0x3d0] sm:$0xff]
    %v166 = vld [vmem:[%s1 + $0x3d8] sm:$0xff]
    %v167 = vld [vmem:[%s1 + $0x3e0] sm:$0xff]
    %v168 = vld [vmem:[%s1 + $0x3e8] sm:$0xff]
    %v169 = vld [vmem:[%s1 + $0x3f0] sm:$0xff]
    %v170 = vld [vmem:[%s1 + $0x3f8] sm:$0xff]
    %v179 = vcombine.low %v35, %v37
    %v180 = vcombine.high %v35, %v37
    %v181 = vcombine.low %v39, %v41
    %v182 = vcombine.high %v39, %v41
    %v184 = vunpack.c.l.s4 1983009808
    %v185 = vunpack.c.0.s8 %v184
    %v186 = vlaneseq
    %v187 = vshrl.u32 %v186, 7
    %v188 = vsub.s32 %v185, %v187
    %v189 = vrot.slane %v179, %v188
    %v191 = vunpack.c.l.s4 1983009808
    %v192 = vunpack.c.0.s8 %v191
    %v193 = vlaneseq
    %v194 = vshrl.u32 %v193, 7
    %v195 = vsub.s32 %v192, %v194
    %v196 = vrot.slane %v180, %v195
    %v198 = vunpack.c.l.s4 1983009808
    %v199 = vunpack.c.0.s8 %v198
    %v200 = vlaneseq
    %v201 = vshrl.u32 %v200, 7
    %v202 = vsub.s32 %v199, %v201
    %v203 = vrot.slane %v181, %v202
    %v205 = vunpack.c.l.s4 1983009808
    %v206 = vunpack.c.0.s8 %v205
    %v207 = vlaneseq
    %v208 = vshrl.u32 %v207, 7
    %v209 = vsub.s32 %v206, %v208
    %v210 = vrot.slane %v182, %v209
    %v211 = vcombine.low %v189, %v203
    %v212 = vcombine.high %v189, %v203
    %v213 = vcombine.low %v196, %v210
    %v214 = vcombine.high %v196, %v210
    %v215 = vcombine.low %v36, %v38
    %v216 = vcombine.high %v36, %v38
    %v217 = vcombine.low %v40, %v42
    %v218 = vcombine.high %v40, %v42
    %v220 = vunpack.c.l.s4 1983009808
    %v221 = vunpack.c.0.s8 %v220
    %v222 = vlaneseq
    %v223 = vshrl.u32 %v222, 7
    %v224 = vsub.s32 %v221, %v223
    %v225 = vrot.slane %v215, %v224
    %v227 = vunpack.c.l.s4 1983009808
    %v228 = vunpack.c.0.s8 %v227
    %v229 = vlaneseq
    %v230 = vshrl.u32 %v229, 7
    %v231 = vsub.s32 %v228, %v230
    %v232 = vrot.slane %v216, %v231
    %v234 = vunpack.c.l.s4 1983009808
    %v235 = vunpack.c.0.s8 %v234
    %v236 = vlaneseq
    %v237 = vshrl.u32 %v236, 7
    %v238 = vsub.s32 %v235, %v237
    %v239 = vrot.slane %v217, %v238
    %v241 = vunpack.c.l.s4 1983009808
    %v242 = vunpack.c.0.s8 %v241
    %v243 = vlaneseq
    %v244 = vshrl.u32 %v243, 7
    %v245 = vsub.s32 %v242, %v244
    %v246 = vrot.slane %v218, %v245
    %v247 = vcombine.low %v225, %v239
    %v248 = vcombine.high %v225, %v239
    %v249 = vcombine.low %v232, %v246
    %v250 = vcombine.high %v232, %v246
    %259 = vmatprep.subr.mxu0 0.0
    %260 = vmatpush1.msra.mxu0 %v43
    %261 = vmatprep.subr.mxu0 0.0
    %262 = vmatpush1.msra.mxu0 %v44
    %263 = vmatprep.subr.mxu0 0.0
    %264 = vmatpush1.msra.mxu0 %v45
    %265 = vmatprep.subr.mxu0 0.0
    %266 = vmatpush1.msra.mxu0 %v46
    %267 = vmatprep.subr.mxu0 0.0
    %268 = vmatpush1.msra.mxu0 %v47
    %269 = vmatprep.subr.mxu0 0.0
    %270 = vmatpush1.msra.mxu0 %v48
    %271 = vmatprep.subr.mxu0 0.0
    %272 = vmatpush1.msra.mxu0 %v49
    %273 = vmatprep.subr.mxu0 0.0
    %274 = vmatpush1.msra.mxu0 %v50
    %275 = vmatprep.subr.mxu0 0.0
    %276 = vmatpush1.msra.mxu0 %v51
    %277 = vmatprep.subr.mxu0 0.0
    %278 = vmatpush1.msra.mxu0 %v52
    %279 = vmatprep.subr.mxu0 0.0
    %280 = vmatpush1.msra.mxu0 %v53
    %281 = vmatprep.subr.mxu0 0.0
    %282 = vmatpush1.msra.mxu0 %v54
    %283 = vmatprep.subr.mxu0 0.0
    %284 = vmatpush1.msra.mxu0 %v55
    %285 = vmatprep.subr.mxu0 0.0
    %286 = vmatpush1.msra.mxu0 %v56
    %287 = vmatprep.subr.mxu0 0.0
    %288 = vmatpush1.msra.mxu0 %v57
    %289 = vmatprep.subr.mxu0 0.0
    %290 = vmatpush1.msra.mxu0 %v58
    %291 = vmatprep.subr.mxu0 0.0
    %292 = vmatpush1.msra.mxu0 %v59
    %293 = vmatprep.subr.mxu0 0.0
    %294 = vmatpush1.msra.mxu0 %v60
    %295 = vmatprep.subr.mxu0 0.0
    %296 = vmatpush1.msra.mxu0 %v61
    %297 = vmatprep.subr.mxu0 0.0
    %298 = vmatpush1.msra.mxu0 %v62
    %299 = vmatprep.subr.mxu0 0.0
    %300 = vmatpush1.msra.mxu0 %v63
    %301 = vmatprep.subr.mxu0 0.0
    %302 = vmatpush1.msra.mxu0 %v64
    %303 = vmatprep.subr.mxu0 0.0
    %304 = vmatpush1.msra.mxu0 %v65
    %305 = vmatprep.subr.mxu0 0.0
    %306 = vmatpush1.msra.mxu0 %v66
    %307 = vmatprep.subr.mxu0 0.0
    %308 = vmatpush1.msra.mxu0 %v67
    %309 = vmatprep.subr.mxu0 0.0
    %310 = vmatpush1.msra.mxu0 %v68
    %311 = vmatprep.subr.mxu0 0.0
    %312 = vmatpush1.msra.mxu0 %v69
    %313 = vmatprep.subr.mxu0 0.0
    %314 = vmatpush1.msra.mxu0 %v70
    %315 = vmatprep.subr.mxu0 0.0
    %316 = vmatpush1.msra.mxu0 %v71
    %317 = vmatprep.subr.mxu0 0.0
    %318 = vmatpush1.msra.mxu0 %v72
    %319 = vmatprep.subr.mxu0 0.0
    %320 = vmatpush1.msra.mxu0 %v73
    %321 = vmatprep.subr.mxu0 0.0
    %322 = vmatpush1.msra.mxu0 %v74
    %323 = vmatprep.mubr.f32.mxu0 %v212
    %324 = vmatmul.mubr.f32.gmra.mrb[0].mxu0 %v211
    %v325 = vpop.f32.mrb[0].mxu0
    %v326 = vadd.f32 0.0, %v325
    %v327 = vpop.f32.mrb[0].mxu0
    %328 = vdwg.mxu0
    %329 = vmatprep.subr.mxu0 0.0
    %330 = vmatpush1.msra.mxu0 %v75
    %331 = vmatprep.subr.mxu0 0.0
    %332 = vmatpush1.msra.mxu0 %v76
    %333 = vmatprep.subr.mxu0 0.0
    %334 = vmatpush1.msra.mxu0 %v77
    %335 = vmatprep.subr.mxu0 0.0
    %336 = vmatpush1.msra.mxu0 %v78
    %337 = vmatprep.subr.mxu0 0.0
    %338 = vmatpush1.msra.mxu0 %v79
    %339 = vmatprep.subr.mxu0 0.0
    %340 = vmatpush1.msra.mxu0 %v80
    %341 = vmatprep.subr.mxu0 0.0
    %342 = vmatpush1.msra.mxu0 %v81
    %343 = vmatprep.subr.mxu0 0.0
    %344 = vmatpush1.msra.mxu0 %v82
    %345 = vmatprep.subr.mxu0 0.0
    %346 = vmatpush1.msra.mxu0 %v83
    %347 = vmatprep.subr.mxu0 0.0
    %348 = vmatpush1.msra.mxu0 %v84
    %349 = vmatprep.subr.mxu0 0.0
    %350 = vmatpush1.msra.mxu0 %v85
    %351 = vmatprep.subr.mxu0 0.0
    %352 = vmatpush1.msra.mxu0 %v86
    %353 = vmatprep.subr.mxu0 0.0
    %354 = vmatpush1.msra.mxu0 %v87
    %355 = vmatprep.subr.mxu0 0.0
    %356 = vmatpush1.msra.mxu0 %v88
    %357 = vmatprep.subr.mxu0 0.0
    %358 = vmatpush1.msra.mxu0 %v89
    %359 = vmatprep.subr.mxu0 0.0
    %360 = vmatpush1.msra.mxu0 %v90
    %361 = vmatprep.subr.mxu0 0.0
    %362 = vmatpush1.msra.mxu0 %v91
    %363 = vmatprep.subr.mxu0 0.0
    %364 = vmatpush1.msra.mxu0 %v92
    %365 = vmatprep.subr.mxu0 0.0
    %366 = vmatpush1.msra.mxu0 %v93
    %367 = vmatprep.subr.mxu0 0.0
    %368 = vmatpush1.msra.mxu0 %v94
    %369 = vmatprep.subr.mxu0 0.0
    %370 = vmatpush1.msra.mxu0 %v95
    %371 = vmatprep.subr.mxu0 0.0
    %372 = vmatpush1.msra.mxu0 %v96
    %373 = vmatprep.subr.mxu0 0.0
    %374 = vmatpush1.msra.mxu0 %v97
    %375 = vmatprep.subr.mxu0 0.0
    %376 = vmatpush1.msra.mxu0 %v98
    %377 = vmatprep.subr.mxu0 0.0
    %378 = vmatpush1.msra.mxu0 %v99
    %379 = vmatprep.subr.mxu0 0.0
    %380 = vmatpush1.msra.mxu0 %v100
    %381 = vmatprep.subr.mxu0 0.0
    %382 = vmatpush1.msra.mxu0 %v101
    %383 = vmatprep.subr.mxu0 0.0
    %384 = vmatpush1.msra.mxu0 %v102
    %385 = vmatprep.subr.mxu0 0.0
    %386 = vmatpush1.msra.mxu0 %v103
    %387 = vmatprep.subr.mxu0 0.0
    %388 = vmatpush1.msra.mxu0 %v104
    %389 = vmatprep.subr.mxu0 0.0
    %390 = vmatpush1.msra.mxu0 %v105
    %391 = vmatprep.subr.mxu0 0.0
    %392 = vmatpush1.msra.mxu0 %v106
    %393 = vmatprep.mubr.f32.mxu0 %v214
    %394 = vmatmul.mubr.f32.gmra.mrb[0].mxu0 %v213
    %v395 = vpop.f32.mrb[0].mxu0
    %v396 = vadd.f32 %v326, %v395
    %v397 = vpop.f32.mrb[0].mxu0
    %398 = vdwg.mxu0
    %399 = vmatprep.subr.mxu0 0.0
    %400 = vmatpush1.msra.mxu0 %v107
    %401 = vmatprep.subr.mxu0 0.0
    %402 = vmatpush1.msra.mxu0 %v108
    %403 = vmatprep.subr.mxu0 0.0
    %404 = vmatpush1.msra.mxu0 %v109
    %405 = vmatprep.subr.mxu0 0.0
    %406 = vmatpush1.msra.mxu0 %v110
    %407 = vmatprep.subr.mxu0 0.0
    %408 = vmatpush1.msra.mxu0 %v111
    %409 = vmatprep.subr.mxu0 0.0
    %410 = vmatpush1.msra.mxu0 %v112
    %411 = vmatprep.subr.mxu0 0.0
    %412 = vmatpush1.msra.mxu0 %v113
    %413 = vmatprep.subr.mxu0 0.0
    %414 = vmatpush1.msra.mxu0 %v114
    %415 = vmatprep.subr.mxu0 0.0
    %416 = vmatpush1.msra.mxu0 %v115
    %417 = vmatprep.subr.mxu0 0.0
    %418 = vmatpush1.msra.mxu0 %v116
    %419 = vmatprep.subr.mxu0 0.0
    %420 = vmatpush1.msra.mxu0 %v117
    %421 = vmatprep.subr.mxu0 0.0
    %422 = vmatpush1.msra.mxu0 %v118
    %423 = vmatprep.subr.mxu0 0.0
    %424 = vmatpush1.msra.mxu0 %v119
    %425 = vmatprep.subr.mxu0 0.0
    %426 = vmatpush1.msra.mxu0 %v120
    %427 = vmatprep.subr.mxu0 0.0
    %428 = vmatpush1.msra.mxu0 %v121
    %429 = vmatprep.subr.mxu0 0.0
    %430 = vmatpush1.msra.mxu0 %v122
    %431 = vmatprep.subr.mxu0 0.0
    %432 = vmatpush1.msra.mxu0 %v123
    %433 = vmatprep.subr.mxu0 0.0
    %434 = vmatpush1.msra.mxu0 %v124
    %435 = vmatprep.subr.mxu0 0.0
    %436 = vmatpush1.msra.mxu0 %v125
    %437 = vmatprep.subr.mxu0 0.0
    %438 = vmatpush1.msra.mxu0 %v126
    %439 = vmatprep.subr.mxu0 0.0
    %440 = vmatpush1.msra.mxu0 %v127
    %441 = vmatprep.subr.mxu0 0.0
    %442 = vmatpush1.msra.mxu0 %v128
    %443 = vmatprep.subr.mxu0 0.0
    %444 = vmatpush1.msra.mxu0 %v129
    %445 = vmatprep.subr.mxu0 0.0
    %446 = vmatpush1.msra.mxu0 %v130
    %447 = vmatprep.subr.mxu0 0.0
    %448 = vmatpush1.msra.mxu0 %v131
    %449 = vmatprep.subr.mxu0 0.0
    %450 = vmatpush1.msra.mxu0 %v132
    %451 = vmatprep.subr.mxu0 0.0
    %452 = vmatpush1.msra.mxu0 %v133
    %453 = vmatprep.subr.mxu0 0.0
    %454 = vmatpush1.msra.mxu0 %v134
    %455 = vmatprep.subr.mxu0 0.0
    %456 = vmatpush1.msra.mxu0 %v135
    %457 = vmatprep.subr.mxu0 0.0
    %458 = vmatpush1.msra.mxu0 %v136
    %459 = vmatprep.subr.mxu0 0.0
    %460 = vmatpush1.msra.mxu0 %v137
    %461 = vmatprep.subr.mxu0 0.0
    %462 = vmatpush1.msra.mxu0 %v138
    %463 = vmatprep.mubr.f32.mxu0 %v248
    %464 = vmatmul.mubr.f32.gmra.mrb[0].mxu0 %v247
    %v465 = vpop.f32.mrb[0].mxu0
    %v466 = vadd.f32 %v396, %v465
    %v467 = vpop.f32.mrb[0].mxu0
    %468 = vdwg.mxu0
    %469 = vmatprep.subr.mxu0 0.0
    %470 = vmatpush1.msra.mxu0 %v139
    %471 = vmatprep.subr.mxu0 0.0
    %472 = vmatpush1.msra.mxu0 %v140
    %473 = vmatprep.subr.mxu0 0.0
    %474 = vmatpush1.msra.mxu0 %v141
    %475 = vmatprep.subr.mxu0 0.0
    %476 = vmatpush1.msra.mxu0 %v142
    %477 = vmatprep.subr.mxu0 0.0
    %478 = vmatpush1.msra.mxu0 %v143
    %479 = vmatprep.subr.mxu0 0.0
    %480 = vmatpush1.msra.mxu0 %v144
    %481 = vmatprep.subr.mxu0 0.0
    %482 = vmatpush1.msra.mxu0 %v145
    %483 = vmatprep.subr.mxu0 0.0
    %484 = vmatpush1.msra.mxu0 %v146
    %485 = vmatprep.subr.mxu0 0.0
    %486 = vmatpush1.msra.mxu0 %v147
    %487 = vmatprep.subr.mxu0 0.0
    %488 = vmatpush1.msra.mxu0 %v148
    %489 = vmatprep.subr.mxu0 0.0
    %490 = vmatpush1.msra.mxu0 %v149
    %491 = vmatprep.subr.mxu0 0.0
    %492 = vmatpush1.msra.mxu0 %v150
    %493 = vmatprep.subr.mxu0 0.0
    %494 = vmatpush1.msra.mxu0 %v151
    %495 = vmatprep.subr.mxu0 0.0
    %496 = vmatpush1.msra.mxu0 %v152
    %497 = vmatprep.subr.mxu0 0.0
    %498 = vmatpush1.msra.mxu0 %v153
    %499 = vmatprep.subr.mxu0 0.0
    %500 = vmatpush1.msra.mxu0 %v154
    %501 = vmatprep.subr.mxu0 0.0
    %502 = vmatpush1.msra.mxu0 %v155
    %503 = vmatprep.subr.mxu0 0.0
    %504 = vmatpush1.msra.mxu0 %v156
    %505 = vmatprep.subr.mxu0 0.0
    %506 = vmatpush1.msra.mxu0 %v157
    %507 = vmatprep.subr.mxu0 0.0
    %508 = vmatpush1.msra.mxu0 %v158
    %509 = vmatprep.subr.mxu0 0.0
    %510 = vmatpush1.msra.mxu0 %v159
    %511 = vmatprep.subr.mxu0 0.0
    %512 = vmatpush1.msra.mxu0 %v160
    %513 = vmatprep.subr.mxu0 0.0
    %514 = vmatpush1.msra.mxu0 %v161
    %515 = vmatprep.subr.mxu0 0.0
    %516 = vmatpush1.msra.mxu0 %v162
    %517 = vmatprep.subr.mxu0 0.0
    %518 = vmatpush1.msra.mxu0 %v163
    %519 = vmatprep.subr.mxu0 0.0
    %520 = vmatpush1.msra.mxu0 %v164
    %521 = vmatprep.subr.mxu0 0.0
    %522 = vmatpush1.msra.mxu0 %v165
    %523 = vmatprep.subr.mxu0 0.0
    %524 = vmatpush1.msra.mxu0 %v166
    %525 = vmatprep.subr.mxu0 0.0
    %526 = vmatpush1.msra.mxu0 %v167
    %527 = vmatprep.subr.mxu0 0.0
    %528 = vmatpush1.msra.mxu0 %v168
    %529 = vmatprep.subr.mxu0 0.0
    %530 = vmatpush1.msra.mxu0 %v169
    %531 = vmatprep.subr.mxu0 0.0
    %532 = vmatpush1.msra.mxu0 %v170
    %533 = vmatprep.mubr.f32.mxu0 %v250
    %534 = vmatmul.mubr.f32.gmra.mrb[0].mxu0 %v249
    %v535 = vpop.f32.mrb[0].mxu0
    %v536 = vadd.f32 %v466, %v535
    %v537 = vpop.f32.mrb[0].mxu0
    %538 = vdwg.mxu0
    %v539 = vadd.f32 %v34, %v536
    %vm540 = vcmask 523264
    %541 = vst.msk [vmem:[#allocation2] sm:$0xff] %vm540, %v539
    // Predicated region
    $region34: #{tpu_custom_call.1} parent=1 // pred_check
      %p542 = pneg %p28
    $region35: #{tpu_custom_call.1} parent=1 // pred_check_branch
      %544 = sbr.rel (%p542) target = $region37
    $region36: #{tpu_custom_call.1} parent=1 // pred_region
      %v545 = vld [vmem:[#allocation2] sm:$0xff]
      %v546 = vld [vmem:[%s2] sm:$0x1]
      %v548 = vlaneseq
      %v549 = vshrl.u32 %v548, 7
      %v550 = vsub.s32 0, %v549
      %v551 = vrot.slane %v546, %v550
      %v553 = vadd.f32 %v545, %v551
      %v554 = vmax.f32 %v553, 0.0
      %v555 = vld [vmem:[%s3] sm:$0xff]
      %v556 = vld [vmem:[%s3 + $0x8] sm:$0xff]
      %v557 = vld [vmem:[%s3 + $0x10] sm:$0xff]
      %v558 = vld [vmem:[%s3 + $0x18] sm:$0xff]
      %v559 = vld [vmem:[%s3 + $0x20] sm:$0xff]
      %v560 = vld [vmem:[%s3 + $0x28] sm:$0xff]
      %v561 = vld [vmem:[%s3 + $0x30] sm:$0xff]
      %v562 = vld [vmem:[%s3 + $0x38] sm:$0xff]
      %v563 = vld [vmem:[%s4] sm:$0x1]
      %v565 = vlaneseq
      %v566 = vshrl.u32 %v565, 7
      %v567 = vsub.s32 0, %v566
      %v568 = vrot.slane %v563, %v567
      %v571 = vsel %vm540, %v554, 0
      %573 = vmatprep.subr.mxu0 0.0
      %574 = vmatpush1.msra.mxu0 %v555
      %575 = vmatprep.subr.mxu0 0.0
      %576 = vmatpush1.msra.mxu0 %v556
      %577 = vmatprep.subr.mxu0 0.0
      %578 = vmatpush1.msra.mxu0 %v557
      %579 = vmatprep.subr.mxu0 0.0
      %580 = vmatpush1.msra.mxu0 %v558
      %581 = vmatprep.subr.mxu0 0.0
      %582 = vmatpush1.msra.mxu0 %v559
      %583 = vmatprep.subr.mxu0 0.0
      %584 = vmatpush1.msra.mxu0 %v560
      %585 = vmatprep.subr.mxu0 0.0
      %586 = vmatpush1.msra.mxu0 %v561
      %587 = vmatprep.subr.mxu0 0.0
      %588 = vmatpush1.msra.mxu0 %v562
      %589 = vmatprep.subr.mxu0 0.0
      %590 = vmatpush1.msra.mxu0 0.0
      %591 = vmatprep.subr.mxu0 0.0
      %592 = vmatpush1.msra.mxu0 0.0
      %593 = vmatprep.subr.mxu0 0.0
      %594 = vmatpush1.msra.mxu0 0.0
      %595 = vmatprep.subr.mxu0 0.0
      %596 = vmatpush1.msra.mxu0 0.0
      %597 = vmatprep.subr.mxu0 0.0
      %598 = vmatpush1.msra.mxu0 0.0
      %599 = vmatprep.subr.mxu0 0.0
      %600 = vmatpush1.msra.mxu0 0.0
      %601 = vmatprep.subr.mxu0 0.0
      %602 = vmatpush1.msra.mxu0 0.0
      %603 = vmatprep.subr.mxu0 0.0
      %604 = vmatpush1.msra.mxu0 0.0
      %605 = vmatprep.subr.mxu0 0.0
      %606 = vmatpush1.msra.mxu0 0.0
      %607 = vmatprep.subr.mxu0 0.0
      %608 = vmatpush1.msra.mxu0 0.0
      %609 = vmatprep.subr.mxu0 0.0
      %610 = vmatpush1.msra.mxu0 0.0
      %611 = vmatprep.subr.mxu0 0.0
      %612 = vmatpush1.msra.mxu0 0.0
      %613 = vmatprep.subr.mxu0 0.0
      %614 = vmatpush1.msra.mxu0 0.0
      %615 = vmatprep.subr.mxu0 0.0
      %616 = vmatpush1.msra.mxu0 0.0
      %617 = vmatprep.subr.mxu0 0.0
      %618 = vmatpush1.msra.mxu0 0.0
      %619 = vmatprep.subr.mxu0 0.0
      %620 = vmatpush1.msra.mxu0 0.0
      %621 = vmatprep.subr.mxu0 0.0
      %622 = vmatpush1.msra.mxu0 0.0
      %623 = vmatprep.subr.mxu0 0.0
      %624 = vmatpush1.msra.mxu0 0.0
      %625 = vmatprep.subr.mxu0 0.0
      %626 = vmatpush1.msra.mxu0 0.0
      %627 = vmatprep.subr.mxu0 0.0
      %628 = vmatpush1.msra.mxu0 0.0
      %629 = vmatprep.subr.mxu0 0.0
      %630 = vmatpush1.msra.mxu0 0.0
      %631 = vmatprep.subr.mxu0 0.0
      %632 = vmatpush1.msra.mxu0 0.0
      %633 = vmatprep.subr.mxu0 0.0
      %634 = vmatpush1.msra.mxu0 0.0
      %635 = vmatprep.subr.mxu0 0.0
      %636 = vmatpush1.msra.mxu0 0.0
      %637 = vmatprep.mubr.f32.mxu0 0.0
      %638 = vmatmul.mubr.f32.gmra.mrb[0].mxu0 %v571
      %v639 = vpop.f32.mrb[0].mxu0
      %v640 = vadd.f32 %v568, %v639
      %v641 = vpop.f32.mrb[0].mxu0
      %642 = vdwg.mxu0
      %v643 = vmax.f32 %v640, 0.0
      %v644 = vld [vmem:[%s5] sm:$0x1]
      %v646 = vlaneseq
      %v647 = vshrl.u32 %v646, 7
      %v648 = vsub.s32 0, %v647
      %v649 = vrot.slane %v644, %v648
      %v651 = vmul.f32 %v643, %v649
      %vm652 = vcmask 261120
      %v653 = vsel %vm652, %v651, 0.0
      %654 = vadd.xlane.f32.xlu0 %v653
      %v655 = vpop.xlane.xlu0 %654
      %v656 = vld [vmem:[#allocation3] sm:$0x1]
      %v658 = vlaneseq
      %v659 = vshrl.u32 %v658, 7
      %v660 = vsub.s32 0, %v659
      %v661 = vrot.slane %v656, %v660
      %v663 = vadd.f32 %v655, %v661
      %v664 = vxor.u32 %v663, 2147483648
      %v665 = vmul.f32 %v664, 1.442695
      %v666 = vpow.pop %v665
      %v667 = vadd.f32 %v666, 1.0
      %v668 = vrcp.pop %v667
      %v669 = vmul.f32 1.0, %v668
      %vm670 = vcmask 7168
      %671 = vst.msk [vmem:[#allocation4] sm:$0xff] %vm670, %v669
    $region37: #{tpu_custom_call.1} parent=1 // pred_fallthru
      _
    // Predicated region
    $region38: #{tpu_custom_call.1} parent=1 // pred_check
      _
    $region39: #{tpu_custom_call.1} parent=1 // pred_check_branch
      %673 = sbr.rel (0) target = $region41
    $region40: #{tpu_custom_call.1} parent=1 // pred_region
      // Predicated region
      $region42: #{tpu_custom_call.1} parent=40 // pred_check
        _
      $region43: #{tpu_custom_call.1} parent=40 // pred_check_branch
        %675 = sbr.rel (0) target = $region45
      $region44: #{tpu_custom_call.1} parent=40 // pred_region
        // Predicated region
        $region46: #{tpu_custom_call.1} parent=44 // pred_check
          _
        $region47: #{tpu_custom_call.1} parent=44 // pred_check_branch
          %677 = sbr.rel target = $region49
        $region48: #{tpu_custom_call.1} parent=44 // pred_region
          // Predicated region
          $region61: #{tpu_custom_call.1} parent=48 // pred_check
            _
          $region62: #{tpu_custom_call.1} parent=48 // pred_check_branch
            %692 = sbr.rel (0) target = $region64
          $region63: #{tpu_custom_call.1} parent=48 // pred_region
            loop: start=0, step=1, limit=1
            $region65: #{tpu_custom_call.1} parent=63 // loop_pre_header
              _
            $region66: #{tpu_custom_call.1} parent=63 // loop_header
              %s695 = sphi 0, %s699
              %p696 = scmp.ge.s32.totalorder %s695, 1
              %s700 = sphi [#allocation4], [#allocation4]
              %s701 = sphi %s7, %s7
            $region67: #{tpu_custom_call.1} parent=63 // loop_header_branch
              %698 = sbr.rel (%p696) target = $region71
            $region68: #{tpu_custom_call.1} parent=63 // loop_body
              %v702 = vld [vmem:[%s700] sm:$0x3]
              %703 = vst [vmem:[%s701] sm:$0x3] %v702
            $region69: #{tpu_custom_call.1} parent=63 // loop_footer
              %s699 = sadd.s32 1, %s695
            $region70: #{tpu_custom_call.1} parent=63 // loop_footer_branch
              %694 = sbr.rel target = $region66
            $region71: #{tpu_custom_call.1} parent=63 // loop_exit
              _
          $region64: #{tpu_custom_call.1} parent=48 // pred_fallthru
            _
        $region49: #{tpu_custom_call.1} parent=44 // pred_fallthru
          _
        // Predicated region
        $region50: #{tpu_custom_call.1} parent=44 // pred_check
          _
        $region51: #{tpu_custom_call.1} parent=44 // pred_check_branch
          %679 = sbr.rel (0) target = $region53
        $region52: #{tpu_custom_call.1} parent=44 // pred_region
          loop: start=0, step=1, limit=1
          $region54: #{tpu_custom_call.1} parent=52 // loop_pre_header
            _
          $region55: #{tpu_custom_call.1} parent=52 // loop_header
            %s682 = sphi 0, %s686
            %p683 = scmp.ge.s32.totalorder %s682, 1
            %s687 = sphi [#allocation4], [#allocation4]
            %s688 = sphi %s7, %s7
          $region56: #{tpu_custom_call.1} parent=52 // loop_header_branch
            %685 = sbr.rel (%p683) target = $region60
          $region57: #{tpu_custom_call.1} parent=52 // loop_body
            %v689 = vld [vmem:[%s687] sm:$0x3]
            %690 = vst [vmem:[%s688] sm:$0x3] %v689
          $region58: #{tpu_custom_call.1} parent=52 // loop_footer
            %s686 = sadd.s32 1, %s682
          $region59: #{tpu_custom_call.1} parent=52 // loop_footer_branch
            %681 = sbr.rel target = $region55
          $region60: #{tpu_custom_call.1} parent=52 // loop_exit
            _
        $region53: #{tpu_custom_call.1} parent=44 // pred_fallthru
          _
      $region45: #{tpu_custom_call.1} parent=40 // pred_fallthru
        _
      %704 = vnop
    $region41: #{tpu_custom_call.1} parent=1 // pred_fallthru
      _
    // Predicated region
    $region72: #{tpu_custom_call.1} parent=1 // pred_check
      _
    $region73: #{tpu_custom_call.1} parent=1 // pred_check_branch
      %706 = sbr.rel (0) target = $region75
    $region74: #{tpu_custom_call.1} parent=1 // pred_region
      _
    $region75: #{tpu_custom_call.1} parent=1 // pred_fallthru
      _

</llo_original>
